<compile_context>
chip_gen: v6e
topology: v6e:2x2x1
jax: 0.10.0
libtpu: 0.0.40
codegen_flags: <defaults>
</compile_context>

<pallas_src>
import math
from collections import namedtuple

import jax
import jax.numpy as jnp
from jax.experimental import pallas as pl
from jax.experimental.pallas import tpu as pltpu

SphericalPointCloud = namedtuple("SphericalPointCloud", ["xyz", "feats", "anchors"])

_MiB = 1024 * 1024


def _vmem_budgets():
    """Per-generation VMEM budgets (v5e/v6e: 128 MiB physical, v7x: 64 MiB)."""
    cap = 64 * _MiB
    try:
        cap = int(getattr(pltpu.get_tpu_info(), "vmem_capacity_bytes", cap))
    except Exception:
        pass
    limit = min(96 * _MiB, (cap * 3) // 4)      # scoped-VMEM request
    return limit, (limit * 3) // 5              # double-buffered working-set target


_VMEM_LIMIT_BYTES, _TILE_BUDGET_BYTES = _vmem_budgets()


def _round_up(x, m):
    return (x + m - 1) // m * m


def _pick_tile(rows, bytes_per_row, budget, cap, align=16):
    """Largest `align`-multiple tile within the VMEM budget.

    Returns (tile, padded_rows); pads instead of falling back to a
    full-extent (possibly over-budget) block when no divisor exists.
    """
    limit = budget // max(1, bytes_per_row)
    limit = max(align, (min(limit, cap) // align) * align)
    limit = min(limit, _round_up(rows, align))
    for t in range(limit, align - 1, -align):
        if rows % t == 0:
            return t, rows
    return limit, _round_up(rows, limit)


# ----------------------------------------------------------------------------
# Pallas kernels
# ----------------------------------------------------------------------------
def _make_zpconv_kernel(K):
    def kernel(g_ref, wn_ref, w_ref, y_ref, st_ref):
        # g  : (P, Q, D)    gathered neighbor features, D = nn*Cin, bf16
        # wn : (K, Q, D)    per-kernel-point neighbor weights (expanded over Cin), bf16
        # w  : (K, D, Cout) conv weight expanded over the neighbor axis, bf16
        g = g_ref[...].astype(jnp.float32)            # f32 VPU math (v5e-safe)
        P, Q, D = g.shape
        cout = w_ref.shape[-1]
        acc = jnp.zeros((P * Q, cout), jnp.float32)
        # Unrolled loop over kernel points: no K*D-wide temporary, bf16 MXU
        # operands, f32 accumulation.
        # TODO(synk): when K*Cin >= ~128 a cheaper contraction is h = sum_j g*wn
        # first, then one (K*Cin, Cout) matmul (nn x fewer MXU flops); not worth
        # it at these channel widths.
        for k in range(K):
            wn_k = wn_ref[k].astype(jnp.float32)      # (Q, D)
            prod = (g * wn_k[None, :, :]).astype(jnp.bfloat16)
            acc = acc + jnp.dot(prod.reshape(P * Q, D), w_ref[k],
                                preferred_element_type=jnp.float32)
        y_ref[...] = acc.reshape(P, Q, cout).astype(y_ref.dtype)
        # fused per-tile BatchNorm statistics: row 0 = sum, row 1 = sum(y^2)
        st_ref[...] = jnp.concatenate(
            [jnp.sum(acc, axis=0, keepdims=True),
             jnp.sum(acc * acc, axis=0, keepdims=True),
             jnp.zeros((6, cout), jnp.float32)], axis=0)
    return kernel


def zpconv_pallas(G, Wn, Wexp, *, anchor_major):
    """Fused ZPConv (neighbor weighting + kernel-point conv) + BN statistics.

    anchor_major=True  (inter): G [B, R, N, D] bf16,  Wn [B, K, N, D] bf16
    anchor_major=False (intra): G [B, N, R, D] bf16,  Wn [K, R, D] bf16
    Wexp: [K, D, Cout] bf16 (conv weight, repeated over the neighbor axis).
    Returns y (bf16, same leading layout as G, last dim Cout) and
    stats [B, NT, 8, Cout] per-tile partial sums (row0=sum, row1=sumsq).
    """
    if anchor_major:
        B, R, N, D = G.shape
    else:
        B, N, R, D = G.shape
    K, _, Cout = Wexp.shape

    # Conservative VMEM bytes per point row: bf16 I/O blocks x2 buffers plus
    # f32 in-kernel temporaries; constant blocks (weights / intra Wn) are fixed.
    per_row = R * (10 * D + 8 * Cout) + (4 * K * D if anchor_major else 0)
    fixed = 4 * K * D * Cout + (0 if anchor_major else 4 * K * R * D) + 64 * Cout
    budget = max(16 * per_row, _TILE_BUDGET_BYTES - fixed)
    cap = _round_up(N, 16)
    if B == 1 and cap >= 32:
        cap = ((cap // 2) // 16) * 16   # keep >=2 point tiles for the 2nd v7x core
    tn, Np = _pick_tile(N, per_row, budget, cap)

    if Np != N:
        pad = Np - N                     # zero rows -> zero y -> stats unaffected
        if anchor_major:
            G = jnp.pad(G, ((0, 0), (0, 0), (0, pad), (0, 0)))
            Wn = jnp.pad(Wn, ((0, 0), (0, 0), (0, pad), (0, 0)))
        else:
            G = jnp.pad(G, ((0, 0), (0, pad), (0, 0), (0, 0)))
    NT = Np // tn

    if anchor_major:
        g_spec = pl.BlockSpec((None, R, tn, D), lambda b, j: (b, 0, j, 0))
        wn_spec = pl.BlockSpec((None, K, tn, D), lambda b, j: (b, 0, j, 0))
        y_shape = (B, R, Np, Cout)
        y_spec = pl.BlockSpec((None, R, tn, Cout), lambda b, j: (b, 0, j, 0))
    else:
        g_spec = pl.BlockSpec((None, tn, R, D), lambda b, j: (b, j, 0, 0))
        wn_spec = pl.BlockSpec((K, R, D), lambda b, j: (0, 0, 0))
        y_shape = (B, Np, R, Cout)
        y_spec = pl.BlockSpec((None, tn, R, Cout), lambda b, j: (b, j, 0, 0))

    w_spec = pl.BlockSpec((K, D, Cout), lambda b, j: (0, 0, 0))
    st_spec = pl.BlockSpec((None, None, 8, Cout), lambda b, j: (b, j, 0, 0))

    y, stats = pl.pallas_call(
        _make_zpconv_kernel(K),
        out_shape=(jax.ShapeDtypeStruct(y_shape, jnp.bfloat16),
                   jax.ShapeDtypeStruct((B, NT, 8, Cout), jnp.float32)),
        grid=(B, NT),
        in_specs=[g_spec, wn_spec, w_spec],
        out_specs=(y_spec, st_spec),
        compiler_params=pltpu.CompilerParams(
            dimension_semantics=("parallel", "parallel"),
            vmem_limit_bytes=_VMEM_LIMIT_BYTES),
    )(G, Wn, Wexp)

    if Np != N:
        y = y[:, :, :N, :] if anchor_major else y[:, :N, :, :]
    return y, stats


def _bn_relu_kernel(y_ref, s_ref, b_ref, o_ref):
    y = y_ref[...].astype(jnp.float32)
    o_ref[...] = jnp.maximum(y * s_ref[...] + b_ref[...], 0.0).astype(o_ref.dtype)


def _lane_group(rows, chans):
    if chans % 128 == 0:
        return 1
    g = 128 // math.gcd(chans, 128)
    return g if rows % g == 0 else 1


def bn_relu_pallas(y, scale, bias):
    """y: [M, C] bf16 -> relu(y*scale + bias), bf16 (f32 math in-kernel).

    Lane-dense layout: the (M, C) array is viewed as (M/g, g*C) so every
    load/store is a full 128-lane vector even for small C.
    """
    M, C = y.shape
    g = _lane_group(M, C)
    Mg, Cg = M // g, C * g
    yv = y.reshape(Mg, Cg)
    s = jnp.tile(scale.astype(jnp.float32), g).reshape(1, Cg)
    b = jnp.tile(bias.astype(jnp.float32), g).reshape(1, Cg)

    tm, Mp = _pick_tile(Mg, 16 * Cg, _TILE_BUDGET_BYTES, cap=4096)
    if Mp != Mg:
        yv = jnp.pad(yv, ((0, Mp - Mg), (0, 0)))

    out = pl.pallas_call(
        _bn_relu_kernel,
        out_shape=jax.ShapeDtypeStruct((Mp, Cg), jnp.bfloat16),
        grid=(Mp // tm,),
        in_specs=[pl.BlockSpec((tm, Cg), lambda i: (i, 0)),
                  pl.BlockSpec((1, Cg), lambda i: (0, 0)),   # constant block
                  pl.BlockSpec((1, Cg), lambda i: (0, 0))],
        out_specs=pl.BlockSpec((tm, Cg), lambda i: (i, 0)),
        compiler_params=pltpu.CompilerParams(
            dimension_semantics=("parallel",),
            vmem_limit_bytes=_VMEM_LIMIT_BYTES),
    )(yv, s, b)
    if Mp != Mg:
        out = out[:Mg]
    return out.reshape(M, C)


# ----------------------------------------------------------------------------
# Plain-JAX glue: neighbor indices, kernel-point weights, BN scale/bias
# ----------------------------------------------------------------------------
def knn(xyz, k):
    d2 = jnp.sum((xyz[:, :, None, :] - xyz[:, None, :, :]) ** 2, axis=-1)
    neg, idx = jax.lax.top_k(-d2, k)
    return idx, jnp.sqrt(jnp.maximum(-neg, 0.0))          # [B, N, k] each


def inter_kernel_weights(dist, radius, sigma, kernel_size):
    # TODO(synk): exact zptk.InterZPConv kernel-weight formula unavailable;
    # Gaussian RBF around kernel radii, masked by `radius`.
    r_k = jnp.linspace(0.0, radius, kernel_size)
    w = jnp.exp(-((dist[..., None] - r_k) ** 2) / (2.0 * sigma ** 2))
    mask = (dist <= radius).astype(jnp.float32)[..., None]
    return w * mask                                        # [B, N, nn, K]


def anchor_neighbors(anchors, k):
    cosang = jnp.clip(anchors @ anchors.T, -1.0, 1.0)
    ang = jnp.arccos(cosang)                               # [A, A]
    neg, idx = jax.lax.top_k(-ang, k)
    return idx, -neg                                       # [A_out, nn] each


def intra_kernel_weights(ang, aperture, sigma, kernel_size):
    # TODO(synk): exact zptk.IntraZPConv kernel-weight formula unavailable;
    # Gaussian RBF over angular distance, masked by `aperture`.
    a_k = jnp.linspace(0.0, aperture, kernel_size)
    w = jnp.exp(-((ang[..., None] - a_k) ** 2) / (2.0 * sigma ** 2))
    mask = (ang <= aperture).astype(jnp.float32)[..., None]
    return w * mask                                        # [A_out, nn, K]


def _expand_wn_inter(wn_raw, cin):
    """[B, N, nn, K] -> [B, K, N, nn*cin], matching the (j, c) flattening of G."""
    w = jnp.transpose(wn_raw, (0, 3, 1, 2))                # [B, K, N, nn]
    return jnp.repeat(w, cin, axis=-1).astype(jnp.bfloat16)


def _expand_wn_intra(wk_raw, cin):
    """[A_out, nn, K] -> [K, A_out, nn*cin]."""
    w = jnp.transpose(wk_raw, (2, 0, 1))                   # [K, A_out, nn]
    return jnp.repeat(w, cin, axis=-1).astype(jnp.bfloat16)


def _expand_weight(W, nn_):
    """W [K, Cin, Cout] -> [K, nn*Cin, Cout] (repeated over the neighbor axis)."""
    return jnp.tile(W, (1, nn_, 1)).astype(jnp.bfloat16)


def bn_scale_bias(stats, count, gamma, beta, eps=1e-5):
    # Training-mode BatchNorm2d with batch statistics over (B, N, A); the
    # per-tile sums / sums-of-squares were produced inside the conv kernel.
    # Padded rows contribute exact zeros, so `count` is the real element count.
    tot = jnp.sum(stats, axis=(0, 1))                      # (8, Cout)
    mean = tot[0] / count
    var = jnp.maximum(tot[1] / count - mean * mean, 0.0)   # biased, like PyTorch
    scale = gamma / jnp.sqrt(var + eps)
    bias = beta - mean * scale
    return scale, bias


# ----------------------------------------------------------------------------
# Block forward passes (canonical feats layout: [B, A, N, C])
# ----------------------------------------------------------------------------
def inter_block_forward(x, wdict, args, inter_idx, inter_w):
    xyz, feats, anchors = x                                # feats [B, A, N, Cin]
    B, A, N, Cin = feats.shape
    K = args["kernel_size"]
    nn_sp = args["n_neighbor"]
    Cout = wdict["W"].shape[2]
    # TODO(synk): `multiplier` / `lazy_sample` subsampling of zptk.InterZPConv
    # is unspecified; stride==1 keeps all points (no subsampling).
    if inter_idx is None:
        inter_idx, dist = knn(xyz, nn_sp)                               # [B, N, nn]
        inter_w = inter_kernel_weights(dist, args["radius"], args["sigma"], K)

    # Neighbor gather (XLA side), bf16 to halve the nn-amplified traffic.
    # TODO(synk): an in-kernel scalar-prefetch DMA gather would remove this
    # HBM round trip of the amplified tensor entirely.
    idx_b = jnp.broadcast_to(inter_idx.reshape(B, 1, N * nn_sp, 1),
                             (B, A, N * nn_sp, Cin))
    G = jnp.take_along_axis(feats.astype(jnp.bfloat16), idx_b, axis=2)  # [B, A, N*nn, Cin]
    G = G.reshape(B, A, N, nn_sp * Cin)

    Wn = _expand_wn_inter(inter_w, Cin)                    # [B, K, N, nn*Cin]
    Wexp = _expand_weight(wdict["W"], nn_sp)               # [K, nn*Cin, Cout]

    y, stats = zpconv_pallas(G, Wn, Wexp, anchor_major=True)   # [B, A, N, Cout] bf16
    scale, bias = bn_scale_bias(stats, B * A * N, wdict["gamma"], wdict["beta"])
    y = bn_relu_pallas(y.reshape(B * A * N, Cout), scale, bias)
    y = y.reshape(B, A, N, Cout)
    return inter_idx, inter_w, SphericalPointCloud(xyz, y, anchors)


def intra_block_forward(x, wdict, args):
    xyz, feats, anchors = x                                # feats [B, A, N, Cin]
    B, A, N, Cin = feats.shape
    K = args["kernel_size"]
    nn_a = args["anchor_nn"]
    Cout = wdict["W"].shape[2]

    idx, ang = anchor_neighbors(anchors, nn_a)             # [A_out, nn]
    A_out = idx.shape[0]
    Wk = intra_kernel_weights(ang, args["aperture"], args["sigma"], K)

    # Transpose the SMALL un-gathered feature map (not the amplified gather).
    feats_bnac = jnp.transpose(feats, (0, 2, 1, 3)).astype(jnp.bfloat16)  # [B, N, A, Cin]
    G = feats_bnac[:, :, idx.reshape(-1), :]               # [B, N, A_out*nn, Cin]
    G = G.reshape(B, N, A_out, nn_a * Cin)

    Wn = _expand_wn_intra(Wk, Cin)                         # [K, A_out, nn*Cin]
    Wexp = _expand_weight(wdict["W"], nn_a)                # [K, nn*Cin, Cout]

    y, stats = zpconv_pallas(G, Wn, Wexp, anchor_major=False)   # [B, N, A_out, Cout]
    scale, bias = bn_scale_bias(stats, B * N * A_out, wdict["gamma"], wdict["beta"])
    y = bn_relu_pallas(y.reshape(B * N * A_out, Cout), scale, bias)
    y = y.reshape(B, N, A_out, Cout)
    feats_out = jnp.transpose(y, (0, 2, 1, 3))             # canonical [B, A_out, N, Cout]
    return SphericalPointCloud(xyz, feats_out, anchors)


class BasicZPConvBlockPallas:
    def __init__(self, params, key):
        self.params = params
        self.weights = []
        for p in params:
            a = p["args"]
            key, k1, k2, k3 = jax.random.split(key, 4)
            Cin, Cout, K = a["dim_in"], a["dim_out"], a["kernel_size"]
            W = jax.random.normal(k1, (K, Cin, Cout), jnp.float32) / math.sqrt(K * Cin)
            gamma = 1.0 + 0.1 * jax.random.normal(k2, (Cout,), jnp.float32)
            beta = 0.1 * jax.random.normal(k3, (Cout,), jnp.float32)
            self.weights.append({"W": W, "gamma": gamma, "beta": beta})

    def __call__(self, x):
        inter_idx, inter_w = None, None
        for p, w in zip(self.params, self.weights):
            if p["type"] in ("inter", "inter_block"):
                inter_idx, inter_w, x = inter_block_forward(
                    x, w, p["args"], inter_idx, inter_w)
                if p["args"]["stride"] > 1:
                    inter_idx, inter_w = None, None
            elif p["type"] == "intra_block":
                x = intra_block_forward(x, w, p["args"])
            else:
                # TODO(synk): zptk.AnchorProp source unavailable; not implemented.
                raise NotImplementedError(p["type"])
        return SphericalPointCloud(x.xyz, x.feats.astype(jnp.float32), x.anchors)


# ----------------------------------------------------------------------------
if __name__ == "__main__":
    key = jax.random.PRNGKey(0)
    B, Cin, N, A = 2, 4, 16, 8
    k_xyz, k_feat, k_anchor, k_w = jax.random.split(key, 4)

    xyz = jax.random.normal(k_xyz, (B, N, 3), jnp.float32)
    feats_nchw = jax.random.normal(k_feat, (B, Cin, N, A), jnp.float32)  # PyTorch NCHW
    anchors = jax.random.normal(k_anchor, (A, 3), jnp.float32)
    anchors = anchors / jnp.linalg.norm(anchors, axis=-1, keepdims=True)

    params = [
        {"type": "inter_block",
         "args": dict(dim_in=4, dim_out=8, kernel_size=3, stride=1, radius=2.0,
                      aperture=0.7 * math.pi, sigma=0.5, anchors=A, n_neighbor=8,
                      anchor_nn=4, multiplier=2, lazy_sample=True, norm=None,
                      activation="relu", dropout_rate=0)},
        {"type": "intra_block",
         "args": dict(dim_in=8, dim_out=16, kernel_size=2, aperture=0.7 * math.pi,
                      sigma=0.5, anchor_nn=4, anchor_in=A, anchor_out=None,
                      norm=None, activation="relu", dropout_rate=0)},
    ]

    model = BasicZPConvBlockPallas(params, k_w)

    # NCHW [B, C, N, A] -> canonical anchor-major channel-last [B, A, N, C].
    feats_cl = jnp.transpose(feats_nchw, (0, 3, 2, 1))
    x = SphericalPointCloud(xyz, feats_cl, anchors)

    out = model(x)
    out_nchw = jnp.transpose(out.feats, (0, 3, 2, 1))  # back to [B, C_out, N, A]
    jax.block_until_ready(out_nchw)

    assert out_nchw.shape == (B, 16, N, A), out_nchw.shape
    assert bool(jnp.all(jnp.isfinite(out_nchw)))
    print("KERNEL_OK")
</pallas_src>

<mosaic_0001>
module attributes {stable_mosaic.version = 11 : i64} {
  func.func @kernel(%arg0: i32, %arg1: i32, %arg2: memref<1x8x16x32xbf16, #tpu.memory_space<vmem>>, %arg3: memref<1x3x16x32xbf16, #tpu.memory_space<vmem>>, %arg4: memref<3x32x8xbf16, #tpu.memory_space<vmem>>, %arg5: memref<1x8x16x8xbf16, #tpu.memory_space<vmem>>, %arg6: memref<1x1x8x8xf32, #tpu.memory_space<vmem>>) attributes {dimension_semantics = [#tpu.dimension_semantics<parallel>, #tpu.dimension_semantics<parallel>], iteration_bounds = array<i64: 2, 1>, scalar_prefetch = 0 : i64, scratch_operands = 0 : i64, tpu.core_type = #tpu.core_type<tc>, window_params = [{transform_indices = @transform_0, window_bounds = array<i64: 1, 8, 16, 32>}, {transform_indices = @transform_1, window_bounds = array<i64: 1, 3, 16, 32>}, {pipeline_mode = #tpu.pipeline_mode<synchronous>, transform_indices = @transform_2, window_bounds = array<i64: 3, 32, 8>}, {transform_indices = @transform_3, window_bounds = array<i64: 1, 8, 16, 8>}, {transform_indices = @transform_4, window_bounds = array<i64: 1, 1, 8, 8>}]} {
    %c0 = arith.constant 0 : index
    %c0_0 = arith.constant 0 : index
    %c0_1 = arith.constant 0 : index
    %c0_2 = arith.constant 0 : index
    %0 = vector.load %arg2[%c0, %c0_0, %c0_1, %c0_2] : memref<1x8x16x32xbf16, #tpu.memory_space<vmem>>, vector<1x8x16x32xbf16>
    %1 = vector.shape_cast %0 : vector<1x8x16x32xbf16> to vector<8x16x32xbf16>
    %2 = arith.extf %1 : vector<8x16x32xbf16> to vector<8x16x32xf32>
    %cst = arith.constant 0.000000e+00 : f32
    %3 = vector.broadcast %cst : f32 to vector<128x8xf32>
    %c0_3 = arith.constant 0 : index
    %c0_4 = arith.constant 0 : index
    %c0_5 = arith.constant 0 : index
    %c0_6 = arith.constant 0 : index
    %4 = vector.load %arg3[%c0_3, %c0_4, %c0_5, %c0_6] : memref<1x3x16x32xbf16, #tpu.memory_space<vmem>>, vector<1x1x16x32xbf16>
    %5 = vector.shape_cast %4 : vector<1x1x16x32xbf16> to vector<16x32xbf16>
    %6 = arith.extf %5 : vector<16x32xbf16> to vector<16x32xf32>
    %7 = vector.shape_cast %6 : vector<16x32xf32> to vector<1x16x32xf32>
    %8 = vector.broadcast %7 : vector<1x16x32xf32> to vector<8x16x32xf32>
    %9 = arith.mulf %2, %8 : vector<8x16x32xf32>
    %10 = arith.truncf %9 : vector<8x16x32xf32> to vector<8x16x32xbf16>
    %11 = vector.shape_cast %10 : vector<8x16x32xbf16> to vector<128x32xbf16>
    %c0_7 = arith.constant 0 : index
    %c0_8 = arith.constant 0 : index
    %c0_9 = arith.constant 0 : index
    %12 = vector.load %arg4[%c0_7, %c0_8, %c0_9] : memref<3x32x8xbf16, #tpu.memory_space<vmem>>, vector<1x32x8xbf16>
    %13 = vector.shape_cast %12 : vector<1x32x8xbf16> to vector<32x8xbf16>
    %cst_10 = arith.constant dense<0.000000e+00> : vector<128x8xf32>
    %14 = tpu.matmul %11, %13, %cst_10 {dimension_numbers = #tpu.dot_dimension_numbers<[1], [0], [0], [1], [0, 0, 1, 1], [], []>} : vector<128x32xbf16>, vector<32x8xbf16>, vector<128x8xf32> -> vector<128x8xf32>
    %15 = arith.addf %3, %14 : vector<128x8xf32>
    %c0_11 = arith.constant 0 : index
    %c1 = arith.constant 1 : index
    %c0_12 = arith.constant 0 : index
    %c0_13 = arith.constant 0 : index
    %16 = vector.load %arg3[%c0_11, %c1, %c0_12, %c0_13] : memref<1x3x16x32xbf16, #tpu.memory_space<vmem>>, vector<1x1x16x32xbf16>
    %17 = vector.shape_cast %16 : vector<1x1x16x32xbf16> to vector<16x32xbf16>
    %18 = arith.extf %17 : vector<16x32xbf16> to vector<16x32xf32>
    %19 = vector.shape_cast %18 : vector<16x32xf32> to vector<1x16x32xf32>
    %20 = vector.broadcast %19 : vector<1x16x32xf32> to vector<8x16x32xf32>
    %21 = arith.mulf %2, %20 : vector<8x16x32xf32>
    %22 = arith.truncf %21 : vector<8x16x32xf32> to vector<8x16x32xbf16>
    %23 = vector.shape_cast %22 : vector<8x16x32xbf16> to vector<128x32xbf16>
    %c1_14 = arith.constant 1 : index
    %c0_15 = arith.constant 0 : index
    %c0_16 = arith.constant 0 : index
    %24 = vector.load %arg4[%c1_14, %c0_15, %c0_16] : memref<3x32x8xbf16, #tpu.memory_space<vmem>>, vector<1x32x8xbf16>
    %25 = vector.shape_cast %24 : vector<1x32x8xbf16> to vector<32x8xbf16>
    %cst_17 = arith.constant dense<0.000000e+00> : vector<128x8xf32>
    %26 = tpu.matmul %23, %25, %cst_17 {dimension_numbers = #tpu.dot_dimension_numbers<[1], [0], [0], [1], [0, 0, 1, 1], [], []>} : vector<128x32xbf16>, vector<32x8xbf16>, vector<128x8xf32> -> vector<128x8xf32>
    %27 = arith.addf %15, %26 : vector<128x8xf32>
    %c0_18 = arith.constant 0 : index
    %c2 = arith.constant 2 : index
    %c0_19 = arith.constant 0 : index
    %c0_20 = arith.constant 0 : index
    %28 = vector.load %arg3[%c0_18, %c2, %c0_19, %c0_20] : memref<1x3x16x32xbf16, #tpu.memory_space<vmem>>, vector<1x1x16x32xbf16>
    %29 = vector.shape_cast %28 : vector<1x1x16x32xbf16> to vector<16x32xbf16>
    %30 = arith.extf %29 : vector<16x32xbf16> to vector<16x32xf32>
    %31 = vector.shape_cast %30 : vector<16x32xf32> to vector<1x16x32xf32>
    %32 = vector.broadcast %31 : vector<1x16x32xf32> to vector<8x16x32xf32>
    %33 = arith.mulf %2, %32 : vector<8x16x32xf32>
    %34 = arith.truncf %33 : vector<8x16x32xf32> to vector<8x16x32xbf16>
    %35 = vector.shape_cast %34 : vector<8x16x32xbf16> to vector<128x32xbf16>
    %c2_21 = arith.constant 2 : index
    %c0_22 = arith.constant 0 : index
    %c0_23 = arith.constant 0 : index
    %36 = vector.load %arg4[%c2_21, %c0_22, %c0_23] : memref<3x32x8xbf16, #tpu.memory_space<vmem>>, vector<1x32x8xbf16>
    %37 = vector.shape_cast %36 : vector<1x32x8xbf16> to vector<32x8xbf16>
    %cst_24 = arith.constant dense<0.000000e+00> : vector<128x8xf32>
    %38 = tpu.matmul %35, %37, %cst_24 {dimension_numbers = #tpu.dot_dimension_numbers<[1], [0], [0], [1], [0, 0, 1, 1], [], []>} : vector<128x32xbf16>, vector<32x8xbf16>, vector<128x8xf32> -> vector<128x8xf32>
    %39 = arith.addf %27, %38 : vector<128x8xf32>
    %40 = vector.shape_cast %39 : vector<128x8xf32> to vector<8x16x8xf32>
    %41 = arith.truncf %40 : vector<8x16x8xf32> to vector<8x16x8xbf16>
    %c0_25 = arith.constant 0 : index
    %c0_26 = arith.constant 0 : index
    %c0_27 = arith.constant 0 : index
    %c0_28 = arith.constant 0 : index
    %42 = vector.load %arg5[%c0_25, %c0_26, %c0_27, %c0_28] : memref<1x8x16x8xbf16, #tpu.memory_space<vmem>>, vector<1x8x16x8xbf16>
    %43 = vector.shape_cast %42 : vector<1x8x16x8xbf16> to vector<8x16x8xbf16>
    %44 = vector.shape_cast %41 : vector<8x16x8xbf16> to vector<1x8x16x8xbf16>
    tpu.vector_store %arg5[%c0_25, %c0_26, %c0_27, %c0_28], %44 {strides = array<i32>} : memref<1x8x16x8xbf16, #tpu.memory_space<vmem>>, vector<1x8x16x8xbf16>,
    %cst_29 = arith.constant dense<0.000000e+00> : vector<8xf32>
    %45 = vector.multi_reduction <add>, %39, %cst_29 [0] : vector<128x8xf32> to vector<8xf32>
    %46 = vector.shape_cast %45 : vector<8xf32> to vector<1x8xf32>
    %47 = arith.mulf %39, %39 : vector<128x8xf32>
    %cst_30 = arith.constant dense<0.000000e+00> : vector<8xf32>
    %48 = vector.multi_reduction <add>, %47, %cst_30 [0] : vector<128x8xf32> to vector<8xf32>
    %49 = vector.shape_cast %48 : vector<8xf32> to vector<1x8xf32>
    %cst_31 = arith.constant 0.000000e+00 : f32
    %50 = vector.broadcast %cst_31 : f32 to vector<6x8xf32>
    %51 = tpu.concatenate %46, %49, %50 in 0 : vector<1x8xf32>, vector<1x8xf32>, vector<6x8xf32> -> vector<8x8xf32>
    %c0_32 = arith.constant 0 : index
    %c0_33 = arith.constant 0 : index
    %c0_34 = arith.constant 0 : index
    %c0_35 = arith.constant 0 : index
    %52 = vector.load %arg6[%c0_32, %c0_33, %c0_34, %c0_35] : memref<1x1x8x8xf32, #tpu.memory_space<vmem>>, vector<1x1x8x8xf32>
    %53 = vector.shape_cast %52 : vector<1x1x8x8xf32> to vector<8x8xf32>
    %54 = vector.shape_cast %51 : vector<8x8xf32> to vector<1x1x8x8xf32>
    tpu.vector_store %arg6[%c0_32, %c0_33, %c0_34, %c0_35], %54 {strides = array<i32>} : memref<1x1x8x8xf32, #tpu.memory_space<vmem>>, vector<1x1x8x8xf32>,
    return
  }
  func.func @transform_0(%arg0: i32, %arg1: i32) -> (i32, i32, i32, i32) {
    %c0_i32 = arith.constant 0 : i32
    %c0_i32_0 = arith.constant 0 : i32
    %c0_i32_1 = arith.constant 0 : i32
    return %arg0, %c0_i32, %arg1, %c0_i32_0 : i32, i32, i32, i32
  }
  func.func @transform_1(%arg0: i32, %arg1: i32) -> (i32, i32, i32, i32) {
    %c0_i32 = arith.constant 0 : i32
    %c0_i32_0 = arith.constant 0 : i32
    %c0_i32_1 = arith.constant 0 : i32
    return %arg0, %c0_i32, %arg1, %c0_i32_0 : i32, i32, i32, i32
  }
  func.func @transform_2(%arg0: i32, %arg1: i32) -> (i32, i32, i32) {
    %c0_i32 = arith.constant 0 : i32
    %c0_i32_0 = arith.constant 0 : i32
    %c0_i32_1 = arith.constant 0 : i32
    %c0_i32_2 = arith.constant 0 : i32
    return %c0_i32, %c0_i32_0, %c0_i32_1 : i32, i32, i32
  }
  func.func @transform_3(%arg0: i32, %arg1: i32) -> (i32, i32, i32, i32) {
    %c0_i32 = arith.constant 0 : i32
    %c0_i32_0 = arith.constant 0 : i32
    %c0_i32_1 = arith.constant 0 : i32
    return %arg0, %c0_i32, %arg1, %c0_i32_0 : i32, i32, i32, i32
  }
  func.func @transform_4(%arg0: i32, %arg1: i32) -> (i32, i32, i32, i32) {
    %c0_i32 = arith.constant 0 : i32
    %c0_i32_0 = arith.constant 0 : i32
    %c0_i32_1 = arith.constant 0 : i32
    return %arg0, %arg1, %c0_i32, %c0_i32_0 : i32, i32, i32, i32
  }
}

</mosaic_0001>

<llo_original>
// kernel: tpu_custom_call.1
$region0: #{tpu_custom_call.1}
  #allocation0 [shape = 'u32[]', space=smem, size = 0x4, offset = 0x4, fixed_abs, tag = 'smem constant byte address 0x4 - core index']
  #allocation1 [shape = 'u32[144,128]{1,0:T(1,128)}', space=vmem, size = 0x12000, scoped, tag = 'internal scratch']
  %s0 = inlined_call_operand.hbm [shape: bf16[2,8,16,32], index: 0, kind: input, shape index: {}]
  %s1 = inlined_call_operand.vmem [shape: bf16[2,3,16,32], index: 1, kind: input, shape index: {}]
  %s2 = inlined_call_operand.vmem [shape: bf16[3,32,8], index: 2, kind: input, shape index: {}]
  %s3 = inlined_call_operand.vmem [shape: bf16[2,8,16,8], index: 3, kind: output, shape index: {0}]
  %s4 = inlined_call_operand.hbm [shape: f32[2,1,8,8], index: 4, kind: output, shape index: {1}]
  %5 = xla_tuple %s3, %s4
  %s6 = sld [smem:[#allocation0]]
  $region57: #{tpu_custom_call.1} parent=0
    _
  %s8 = ssub.s32 1, %s6
  %s9 = scalar_select 0, %s8, %s6
  $region1: #{tpu_custom_call.1} parent=0
    #allocation2 [shape = 'u8[65536]{0}', space=vmem, size = 0x10000, scoped, tag = 'input window, operand 0']
    #allocation3 [shape = 's32[2]{0}', space=sflag, size = 0x8, scoped, tag = 'scoped memory for tpu_custom_call.1']
    #allocation4 [shape = 's32[2]{0}', space=sflag, size = 0x8, scoped, tag = 'scoped memory for tpu_custom_call.1']
    #allocation5 [shape = 'u8[8192]{0}', space=vmem, size = 0x2000, scoped, tag = 'output window, operand 1']
    %10 = vsyncpa [#allocation3], 0
    %s11 = scalar_lea.sflag [#allocation3], 1
    %12 = vsyncpa %s11, 0
    %13 = vsyncpa [#allocation4], 0
    %s14 = scalar_lea.sflag [#allocation4], 1
    %15 = vsyncpa %s14, 0
    loop: start=0, step=1, limit=4
    $region2: #{tpu_custom_call.1} parent=1 // loop_pre_header
      _
    $region3: #{tpu_custom_call.1} parent=1 // loop_header
      %s17 = sphi 0, %s21
      %p18 = scmp.ge.s32.totalorder %s17, 4
      %s24 = sphi 0, %s36
      %s25 = sphi 0, %s32
      %s26 = sphi 0, %s24
      %s27 = sphi 0, %s25
      %s28 = sphi 0, %s26
      %s29 = sphi 0, %s27
      %s41 = sphi 0, %s43
      %s44 = sphi 0, %s41
      %s45 = sphi 0, %s44
      %s61 = sphi 0, %s45
      %s69 = sphi 0, %s71
      %s72 = sphi 0, %s69
      %s73 = sphi 0, %s72
      %s89 = sphi 0, %s73
      %s93 = sphi 0, %s93
      %s95 = sphi 0, %s93
      %s96 = sphi 0, %s95
      %s110 = sphi 0, %s96
      %s118 = sphi 0, %s120
      %s121 = sphi 0, %s118
      %s122 = sphi 0, %s121
      %s138 = sphi 0, %s122
      %s146 = sphi 0, %s148
      %s149 = sphi 0, %s146
      %s150 = sphi 0, %s149
      %s166 = sphi 0, %s150
    $region4: #{tpu_custom_call.1} parent=1 // loop_header_branch
      %20 = sbr.rel (%p18) target = $region8
    $region5: #{tpu_custom_call.1} parent=1 // loop_body
      %s22 = ssub.s32 %s17, 1
      %s23 = ssub.s32 %s17, 2
      %s30 = sadd.s32 1, %s25
      %p31 = scmp.ge.s32.totalorder %s30, 1
      %s32 = scalar_select %p31, 0, %s30
      %s33 = sadd.s32 1, %s24
      %s34 = scalar_select %p31, %s33, %s24
      %p35 = scmp.ge.s32.totalorder %s34, 2
      %s36 = scalar_select %p35, 0, %s34
      %s37 = ssub.s32 %s24, %s36
      %s38 = ssub.s32 %s25, %s32
      %s39 = sor.u32 %s37, %s38
      %p40 = scmp.eq.s32.totalorder %s39, 0
      %s42 = sadd.s32 %s41, 1
      %s43 = scalar_select %p40, %s41, %s42
      %p46 = pneg %p40
      %p47 = scmp.eq.s32.totalorder %s17, 1
      %p48 = por %p46, %p47
      %p49 = scmp.ne.s32.totalorder %s41, %s44
      %p50 = scmp.eq.s32.totalorder %s17, 0
      %p51 = por %p49, %p50
      %p52 = scmp.ne.s32.totalorder %s41, %s44
      %p53 = scmp.eq.s32.totalorder %s22, 1
      %p54 = por %p52, %p53
      %p55 = scmp.ne.s32.totalorder %s44, %s45
      %p56 = scmp.eq.s32.totalorder %s22, 0
      %p57 = por %p55, %p56
      %p58 = scmp.ne.s32.totalorder %s44, %s45
      %p59 = scmp.eq.s32.totalorder %s23, 1
      %p60 = por %p58, %p59
      %p62 = scmp.ne.s32.totalorder %s45, %s61
      %p63 = scmp.eq.s32.totalorder %s23, 0
      %p64 = por %p62, %p63
      %s65 = ssub.s32 %s24, %s36
      %s66 = ssub.s32 %s25, %s32
      %s67 = sor.u32 %s65, %s66
      %p68 = scmp.eq.s32.totalorder %s67, 0
      %s70 = sadd.s32 %s69, 1
      %s71 = scalar_select %p68, %s69, %s70
      %p74 = pneg %p68
      %p75 = scmp.eq.s32.totalorder %s17, 1
      %p76 = por %p74, %p75
      %p77 = scmp.ne.s32.totalorder %s69, %s72
      %p78 = scmp.eq.s32.totalorder %s17, 0
      %p79 = por %p77, %p78
      %p80 = scmp.ne.s32.totalorder %s69, %s72
      %p81 = scmp.eq.s32.totalorder %s22, 1
      %p82 = por %p80, %p81
      %p83 = scmp.ne.s32.totalorder %s72, %s73
      %p84 = scmp.eq.s32.totalorder %s22, 0
      %p85 = por %p83, %p84
      %p86 = scmp.ne.s32.totalorder %s72, %s73
      %p87 = scmp.eq.s32.totalorder %s23, 1
      %p88 = por %p86, %p87
      %p90 = scmp.ne.s32.totalorder %s73, %s89
      %p91 = scmp.eq.s32.totalorder %s23, 0
      %p92 = por %p90, %p91
      %s94 = sadd.s32 %s93, 1
      %p97 = scmp.eq.s32.totalorder %s17, 1
      %p98 = scmp.ne.s32.totalorder %s93, %s95
      %p99 = scmp.eq.s32.totalorder %s17, 0
      %p100 = por %p98, %p99
      %p101 = scmp.ne.s32.totalorder %s93, %s95
      %p102 = scmp.eq.s32.totalorder %s22, 1
      %p103 = por %p101, %p102
      %p104 = scmp.ne.s32.totalorder %s95, %s96
      %p105 = scmp.eq.s32.totalorder %s22, 0
      %p106 = por %p104, %p105
      %p107 = scmp.ne.s32.totalorder %s95, %s96
      %p108 = scmp.eq.s32.totalorder %s23, 1
      %p109 = por %p107, %p108
      %p111 = scmp.ne.s32.totalorder %s96, %s110
      %p112 = scmp.eq.s32.totalorder %s23, 0
      %p113 = por %p111, %p112
      %s114 = ssub.s32 %s24, %s36
      %s115 = ssub.s32 %s25, %s32
      %s116 = sor.u32 %s114, %s115
      %p117 = scmp.eq.s32.totalorder %s116, 0
      %s119 = sadd.s32 %s118, 1
      %s120 = scalar_select %p117, %s118, %s119
      %p123 = pneg %p117
      %p124 = scmp.eq.s32.totalorder %s17, 1
      %p125 = por %p123, %p124
      %p126 = scmp.ne.s32.totalorder %s118, %s121
      %p127 = scmp.eq.s32.totalorder %s17, 0
      %p128 = por %p126, %p127
      %p129 = scmp.ne.s32.totalorder %s118, %s121
      %p130 = scmp.eq.s32.totalorder %s22, 1
      %p131 = por %p129, %p130
      %p132 = scmp.ne.s32.totalorder %s121, %s122
      %p133 = scmp.eq.s32.totalorder %s22, 0
      %p134 = por %p132, %p133
      %p135 = scmp.ne.s32.totalorder %s121, %s122
      %p136 = scmp.eq.s32.totalorder %s23, 1
      %p137 = por %p135, %p136
      %p139 = scmp.ne.s32.totalorder %s122, %s138
      %p140 = scmp.eq.s32.totalorder %s23, 0
      %p141 = por %p139, %p140
      %s142 = ssub.s32 %s24, %s36
      %s143 = ssub.s32 %s25, %s32
      %s144 = sor.u32 %s142, %s143
      %p145 = scmp.eq.s32.totalorder %s144, 0
      %s147 = sadd.s32 %s146, 1
      %s148 = scalar_select %p145, %s146, %s147
      %p151 = pneg %p145
      %p152 = scmp.eq.s32.totalorder %s17, 1
      %p153 = por %p151, %p152
      %p154 = scmp.ne.s32.totalorder %s146, %s149
      %p155 = scmp.eq.s32.totalorder %s17, 0
      %p156 = por %p154, %p155
      %p157 = scmp.ne.s32.totalorder %s146, %s149
      %p158 = scmp.eq.s32.totalorder %s22, 1
      %p159 = por %p157, %p158
      %p160 = scmp.ne.s32.totalorder %s149, %s150
      %p161 = scmp.eq.s32.totalorder %s22, 0
      %p162 = por %p160, %p161
      %p163 = scmp.ne.s32.totalorder %s149, %s150
      %p164 = scmp.eq.s32.totalorder %s23, 1
      %p165 = por %p163, %p164
      %p167 = scmp.ne.s32.totalorder %s150, %s166
      %p168 = scmp.eq.s32.totalorder %s23, 0
      %p169 = por %p167, %p168
      %p170 = scmp.le.s32.totalorder 1, %s17
      %p171 = scmp.lt.s32.totalorder %s17, 3
      %p172 = pnand %p170, %p171
      %p173 = pneg %p172
      // Predicated region
      $region9: #{tpu_custom_call.1} parent=5 // pred_check
        _
      $region10: #{tpu_custom_call.1} parent=5 // pred_check_branch
        %175 = sbr.rel (%p172) target = $region12
      $region11: #{tpu_custom_call.1} parent=5 // pred_region
        %s176 = ssub.s32 %s17, 1
        // Predicated region
        $region13: #{tpu_custom_call.1} parent=11 // pred_check
          %p177 = pneg %p106
        $region14: #{tpu_custom_call.1} parent=11 // pred_check_branch
          %179 = sbr.rel (%p177) target = $region16
        $region15: #{tpu_custom_call.1} parent=11 // pred_region
          _
        $region16: #{tpu_custom_call.1} parent=11 // pred_fallthru
          _
      $region12: #{tpu_custom_call.1} parent=5 // pred_fallthru
        _
      %p180 = scmp.lt.s32.totalorder %s17, 2
      // Predicated region
      $region17: #{tpu_custom_call.1} parent=5 // pred_check
        %p181 = pneg %p180
      $region18: #{tpu_custom_call.1} parent=5 // pred_check_branch
        %183 = sbr.rel (%p181) target = $region20
      $region19: #{tpu_custom_call.1} parent=5 // pred_region
        // Predicated region
        $region21: #{tpu_custom_call.1} parent=19 // pred_check
          %p184 = pneg %p51
        $region22: #{tpu_custom_call.1} parent=19 // pred_check_branch
          %186 = sbr.rel (%p184) target = $region24
        $region23: #{tpu_custom_call.1} parent=19 // pred_region
          %s187 = sand.u32 %s41, 1
          %s188 = scalar_lea.sflag [#allocation3], %s187
          %s189 = sand.u32 %s41, 1
          %s190 = smul.addr %s189, 64
          %s191 = scalar_lea.vmem [#allocation2], %s190
          %s192 = smul.u32 2, %s25
          %s194 = ssub.s32 1024, 1024
          %195 = vsyncadd %s188, %s194
          %s196 = smul.addr %s24, 16
          %s197 = sadd.s32 %s192, %s196
          %s198 = smul.addr %s197, 64
          %s199 = scalar_lea.hbm %s0, %s198
          %s200 = sshll.u32 %s191, 4
          %s201 = int_to_ptr.vmem [resolvable:$true] %s200
          %206 = dma.hbm_to_vmem [thread:$0]  %s199, 1024, %s201, %s188, 64, 64, 4
        $region24: #{tpu_custom_call.1} parent=19 // pred_fallthru
          _
        // Predicated region
        $region25: #{tpu_custom_call.1} parent=19 // pred_check
          %p207 = pneg %p79
        $region26: #{tpu_custom_call.1} parent=19 // pred_check_branch
          %209 = sbr.rel (%p207) target = $region28
        $region27: #{tpu_custom_call.1} parent=19 // pred_region
          %s210 = smul.u32 2, %s25
          %p211 = scmp.lt.s32.totalorder %s24, 1
          %s212 = scalar_select %p211, %s24, 1
          %p213 = scmp.lt.s32.totalorder %s210, 1
          %s214 = scalar_select %p213, %s210, 1
          %s215 = smul.addr %s212, 6
          %s216 = sadd.s32 %s214, %s215
          %s217 = smul.addr %s216, 4
          %s218 = scalar_lea.vmem %s1, %s217
          %s219 = smul.u32 2, %s25
        $region28: #{tpu_custom_call.1} parent=19 // pred_fallthru
          _
      $region20: #{tpu_custom_call.1} parent=5 // pred_fallthru
        _
      %p220 = scmp.le.s32.totalorder 1, %s17
      %p221 = scmp.lt.s32.totalorder %s17, 3
      %p222 = pnand %p220, %p221
      %p223 = pneg %p222
      // Predicated region
      $region29: #{tpu_custom_call.1} parent=5 // pred_check
        _
      $region30: #{tpu_custom_call.1} parent=5 // pred_check_branch
        %225 = sbr.rel (%p222) target = $region32
      $region31: #{tpu_custom_call.1} parent=5 // pred_region
        %s226 = ssub.s32 %s17, 1
        %s227 = sand.u32 %s44, 1
        %s228 = scalar_lea.sflag [#allocation3], %s227
        %s229 = sand.u32 %s44, 1
        %s230 = smul.addr %s229, 64
        %s231 = scalar_lea.vmem [#allocation2], %s230
        // Predicated region
        $region33: #{tpu_custom_call.1} parent=31 // pred_check
          %p232 = pneg %p57
        $region34: #{tpu_custom_call.1} parent=31 // pred_check_branch
          %234 = sbr.rel (%p232) target = $region36
        $region35: #{tpu_custom_call.1} parent=31 // pred_region
          %235 = dma.done %s228, 1024
        $region36: #{tpu_custom_call.1} parent=31 // pred_fallthru
          _
        %s236 = sand.u32 %s44, 1
        %s237 = scalar_lea.sflag [#allocation3], %s236
        %s238 = sand.u32 %s44, 1
        %s239 = smul.addr %s238, 64
        %s240 = scalar_lea.vmem [#allocation2], %s239
        %p241 = pneg %p57
        %p242 = pneg %p54
        %s243 = smul.u32 2, %s27
        %p244 = scmp.lt.s32.totalorder %s26, 1
        %s245 = scalar_select %p244, %s26, 1
        %p246 = scmp.lt.s32.totalorder %s243, 1
        %s247 = scalar_select %p246, %s243, 1
        %s248 = smul.addr %s245, 6
        %s249 = sadd.s32 %s247, %s248
        %s250 = smul.addr %s249, 4
        %s251 = scalar_lea.vmem %s1, %s250
        %p252 = pneg %p85
        %p253 = pneg %p82
        %p254 = pneg %p106
        %p255 = pneg %p103
        %p256 = pneg %p134
        %p257 = pneg %p131
        %s258 = smul.u32 2, %s27
        %p259 = scmp.lt.s32.totalorder %s26, 1
        %s260 = scalar_select %p259, %s26, 1
        %p261 = scmp.lt.s32.totalorder %s258, 1
        %s262 = scalar_select %p261, %s258, 1
        %s263 = smul.addr %s260, 16
        %s264 = sadd.s32 %s262, %s263
        %s265 = smul.addr %s264, 4
        %s266 = scalar_lea.vmem %s3, %s265
        %p267 = pneg %p162
        %p268 = pneg %p159
        %s269 = sand.u32 %s149, 1
        %s270 = scalar_lea.sflag [#allocation4], %s269
        %s271 = sand.u32 %s149, 1
        %s272 = smul.addr %s271, 8
        %s273 = scalar_lea.vmem [#allocation5], %s272
        %s274 = smul.u32 2, %s27
        %s275 = smul.u32 2, %s27
        %p276 = scmp.lt.s32.totalorder %s26, 1
        %s277 = scalar_select %p276, %s26, 1
        %p278 = scmp.lt.s32.totalorder %s275, 1
        %s279 = scalar_select %p278, %s275, 1
        %s280 = smul.addr %s277, 6
        %s281 = sadd.s32 %s279, %s280
        %s282 = smul.addr %s281, 4
        %s283 = scalar_lea.vmem %s1, %s282
        %s284 = smul.u32 2, %s27
        %s285 = smul.u32 2, %s27
        %p286 = scmp.lt.s32.totalorder %s26, 1
        %s287 = scalar_select %p286, %s26, 1
        %p288 = scmp.lt.s32.totalorder %s285, 1
        %s289 = scalar_select %p288, %s285, 1
        %s290 = smul.addr %s287, 16
        %s291 = sadd.s32 %s289, %s290
        %s292 = smul.addr %s291, 4
        %s293 = scalar_lea.vmem %s3, %s292
        %s294 = smul.u32 2, %s27
        %v296 = vld [vmem:[%s231] sm:$0xf]
        %v297 = vld [vmem:[%s231 + $0x4] sm:$0xf]
        %v298 = vld [vmem:[%s231 + $0x8] sm:$0xf]
        %v299 = vld [vmem:[%s231 + $0xc] sm:$0xf]
        %v300 = vld [vmem:[%s231 + $0x10] sm:$0xf]
        %v301 = vld [vmem:[%s231 + $0x14] sm:$0xf]
        %v302 = vld [vmem:[%s231 + $0x18] sm:$0xf]
        %v303 = vld [vmem:[%s231 + $0x1c] sm:$0xf]
        %v304 = vld [vmem:[%s231 + $0x20] sm:$0xf]
        %v305 = vld [vmem:[%s231 + $0x24] sm:$0xf]
        %v306 = vld [vmem:[%s231 + $0x28] sm:$0xf]
        %v307 = vld [vmem:[%s231 + $0x2c] sm:$0xf]
        %v308 = vld [vmem:[%s231 + $0x30] sm:$0xf]
        %v309 = vld [vmem:[%s231 + $0x34] sm:$0xf]
        %v310 = vld [vmem:[%s231 + $0x38] sm:$0xf]
        %v311 = vld [vmem:[%s231 + $0x3c] sm:$0xf]
        %v312 = vunpack.c.l.bf16 %v296
        %v313 = vunpack.c.l.bf16 %v297
        %v314 = vunpack.c.l.bf16 %v298
        %v315 = vunpack.c.l.bf16 %v299
        %v316 = vunpack.c.l.bf16 %v300
        %v317 = vunpack.c.l.bf16 %v301
        %v318 = vunpack.c.l.bf16 %v302
        %v319 = vunpack.c.l.bf16 %v303
        %v320 = vunpack.c.l.bf16 %v304
        %v321 = vunpack.c.l.bf16 %v305
        %v322 = vunpack.c.l.bf16 %v306
        %v323 = vunpack.c.l.bf16 %v307
        %v324 = vunpack.c.l.bf16 %v308
        %v325 = vunpack.c.l.bf16 %v309
        %v326 = vunpack.c.l.bf16 %v310
        %v327 = vunpack.c.l.bf16 %v311
        %v328 = vld [vmem:[%s283] sm:$0xf]
        %v329 = vld [vmem:[%s283 + $0x4] sm:$0xf]
        %v330 = vunpack.c.l.bf16 %v328
        %v331 = vunpack.c.l.bf16 %v329
        %v332 = vmul.f32 %v312, %v330
        %v333 = vmul.f32 %v313, %v331
        %v334 = vmul.f32 %v314, %v330
        %v335 = vmul.f32 %v315, %v331
        %v336 = vmul.f32 %v316, %v330
        %v337 = vmul.f32 %v317, %v331
        %v338 = vmul.f32 %v318, %v330
        %v339 = vmul.f32 %v319, %v331
        %v340 = vmul.f32 %v320, %v330
        %v341 = vmul.f32 %v321, %v331
        %v342 = vmul.f32 %v322, %v330
        %v343 = vmul.f32 %v323, %v331
        %v344 = vmul.f32 %v324, %v330
        %v345 = vmul.f32 %v325, %v331
        %v346 = vmul.f32 %v326, %v330
        %v347 = vmul.f32 %v327, %v331
        %v348 = vpack.c.bf16 %v333, %v332
        %v349 = vpack.c.bf16 %v335, %v334
        %v350 = vpack.c.bf16 %v337, %v336
        %v351 = vpack.c.bf16 %v339, %v338
        %v352 = vpack.c.bf16 %v341, %v340
        %v353 = vpack.c.bf16 %v343, %v342
        %v354 = vpack.c.bf16 %v345, %v344
        %v355 = vpack.c.bf16 %v347, %v346
        %v356 = vld [vmem:[%s2] sm:$0xf]
        %v357 = vld [vmem:[%s2 + $0x4] sm:$0xf]
        %v358 = vld [vmem:[%s2 + $0x8] sm:$0xf]
        %v359 = vld [vmem:[%s2 + $0xc] sm:$0xf]
        %s360 = scalar_lea.vmem %s283, 8
        %v361 = vld [vmem:[%s360] sm:$0xf]
        %v362 = vld [vmem:[%s360 + $0x4] sm:$0xf]
        %v363 = vunpack.c.l.bf16 %v361
        %v364 = vunpack.c.l.bf16 %v362
        %v365 = vmul.f32 %v312, %v363
        %v366 = vmul.f32 %v313, %v364
        %v367 = vmul.f32 %v314, %v363
        %v368 = vmul.f32 %v315, %v364
        %v369 = vmul.f32 %v316, %v363
        %v370 = vmul.f32 %v317, %v364
        %v371 = vmul.f32 %v318, %v363
        %v372 = vmul.f32 %v319, %v364
        %v373 = vmul.f32 %v320, %v363
        %v374 = vmul.f32 %v321, %v364
        %v375 = vmul.f32 %v322, %v363
        %v376 = vmul.f32 %v323, %v364
        %v377 = vmul.f32 %v324, %v363
        %v378 = vmul.f32 %v325, %v364
        %v379 = vmul.f32 %v326, %v363
        %v380 = vmul.f32 %v327, %v364
        %v381 = vpack.c.bf16 %v366, %v365
        %v382 = vpack.c.bf16 %v368, %v367
        %v383 = vpack.c.bf16 %v370, %v369
        %v384 = vpack.c.bf16 %v372, %v371
        %v385 = vpack.c.bf16 %v374, %v373
        %v386 = vpack.c.bf16 %v376, %v375
        %v387 = vpack.c.bf16 %v378, %v377
        %v388 = vpack.c.bf16 %v380, %v379
        %s389 = scalar_lea.vmem %s2, 16
        %v390 = vld [vmem:[%s389] sm:$0xf]
        %v391 = vld [vmem:[%s389 + $0x4] sm:$0xf]
        %v392 = vld [vmem:[%s389 + $0x8] sm:$0xf]
        %v393 = vld [vmem:[%s389 + $0xc] sm:$0xf]
        %v398 = vunpack.c.l.b16 %v390
        %v399 = vunpack.c.l.b16 %v391
        %v400 = vunpack.c.l.b16 %v392
        %v401 = vunpack.c.l.b16 %v393
        %v402 = vpack.c.b16 %v399, %v398
        %v403 = vpack.c.b16 %v401, %v400
        %vm406 = vcmask 261120
        %v408 = vsel %vm406, %v381, 0
        %v411 = vsel %vm406, %v382, 0
        %v414 = vsel %vm406, %v383, 0
        %v417 = vsel %vm406, %v384, 0
        %v420 = vsel %vm406, %v385, 0
        %v423 = vsel %vm406, %v386, 0
        %v426 = vsel %vm406, %v387, 0
        %v429 = vsel %vm406, %v388, 0
        %431 = vmatprep.subr.bf16.mxu0 0
        %432 = vmatpush1.bf16.msra.mxu0 0
        %433 = vmatprep.subr.bf16.mxu0 0
        %434 = vmatpush1.bf16.msra.mxu0 0
        %435 = vmatprep.subr.bf16.mxu0 0
        %436 = vmatpush1.bf16.msra.mxu0 0
        %437 = vmatprep.subr.bf16.mxu0 0
        %438 = vmatpush1.bf16.msra.mxu0 0
        %439 = vmatprep.subr.bf16.mxu0 0
        %440 = vmatpush1.bf16.msra.mxu0 0
        %441 = vmatprep.subr.bf16.mxu0 0
        %442 = vmatpush1.bf16.msra.mxu0 0
        %443 = vmatprep.subr.bf16.mxu0 0
        %444 = vmatpush1.bf16.msra.mxu0 %v403
        %445 = vmatprep.subr.bf16.mxu0 0
        %446 = vmatpush1.bf16.msra.mxu0 %v402
        %447 = vmatprep.subr.bf16.mxu0 0
        %448 = vmatpush2.bf16.msra.mxu0 0
        %449 = vmatprep.subr.bf16.mxu0 0
        %450 = vmatpush2.bf16.msra.mxu0 0
        %451 = vmatprep.subr.bf16.mxu0 0
        %452 = vmatpush2.bf16.msra.mxu0 0
        %453 = vmatprep.subr.bf16.mxu0 0
        %454 = vmatpush2.bf16.msra.mxu0 0
        %455 = vmatprep.subr.bf16.mxu0 0
        %456 = vmatpush2.bf16.msra.mxu0 0
        %457 = vmatprep.subr.bf16.mxu0 0
        %458 = vmatpush2.bf16.msra.mxu0 0
        %459 = vmatprep.subr.bf16.mxu0 0
        %460 = vmatpush2.bf16.msra.mxu0 0
        %461 = vmatprep.subr.bf16.mxu0 0
        %462 = vmatpush2.bf16.msra.mxu0 0
        %463 = vmatprep.mubr.bf16.mxu0 0
        %464 = vmatmul.mubr.bf16.gmra.mxu0 %v408
        %v465 = vpop.f32.mrf.mxu0
        %v466 = vadd.f32 0.0, %v465
        %v467 = vpop.f32.mrf.mxu0
        %v468 = vpop.f32.mrf.mxu0
        %v469 = vadd.f32 0.0, %v468
        %v470 = vpop.f32.mrf.mxu0
        %471 = vmatprep.mubr.bf16.mxu0 0
        %472 = vmatmul.mubr.bf16.gmra.mxu0 %v411
        %v473 = vpop.f32.mrf.mxu0
        %v474 = vadd.f32 0.0, %v473
        %v475 = vpop.f32.mrf.mxu0
        %v476 = vpop.f32.mrf.mxu0
        %v477 = vadd.f32 0.0, %v476
        %v478 = vpop.f32.mrf.mxu0
        %479 = vmatprep.mubr.bf16.mxu0 0
        %480 = vmatmul.mubr.bf16.gmra.mxu0 %v414
        %v481 = vpop.f32.mrf.mxu0
        %v482 = vadd.f32 0.0, %v481
        %v483 = vpop.f32.mrf.mxu0
        %v484 = vpop.f32.mrf.mxu0
        %v485 = vadd.f32 0.0, %v484
        %v486 = vpop.f32.mrf.mxu0
        %487 = vmatprep.mubr.bf16.mxu0 0
        %488 = vmatmul.mubr.bf16.gmra.mxu0 %v417
        %v489 = vpop.f32.mrf.mxu0
        %v490 = vadd.f32 0.0, %v489
        %v491 = vpop.f32.mrf.mxu0
        %v492 = vpop.f32.mrf.mxu0
        %v493 = vadd.f32 0.0, %v492
        %v494 = vpop.f32.mrf.mxu0
        %495 = vmatprep.mubr.bf16.mxu0 0
        %496 = vmatmul.mubr.bf16.gmra.mxu0 %v420
        %v497 = vpop.f32.mrf.mxu0
        %v498 = vadd.f32 0.0, %v497
        %v499 = vpop.f32.mrf.mxu0
        %v500 = vpop.f32.mrf.mxu0
        %v501 = vadd.f32 0.0, %v500
        %v502 = vpop.f32.mrf.mxu0
        %503 = vmatprep.mubr.bf16.mxu0 0
        %504 = vmatmul.mubr.bf16.gmra.mxu0 %v423
        %v505 = vpop.f32.mrf.mxu0
        %v506 = vadd.f32 0.0, %v505
        %v507 = vpop.f32.mrf.mxu0
        %v508 = vpop.f32.mrf.mxu0
        %v509 = vadd.f32 0.0, %v508
        %v510 = vpop.f32.mrf.mxu0
        %511 = vmatprep.mubr.bf16.mxu0 0
        %512 = vmatmul.mubr.bf16.gmra.mxu0 %v426
        %v513 = vpop.f32.mrf.mxu0
        %v514 = vadd.f32 0.0, %v513
        %v515 = vpop.f32.mrf.mxu0
        %v516 = vpop.f32.mrf.mxu0
        %v517 = vadd.f32 0.0, %v516
        %v518 = vpop.f32.mrf.mxu0
        %519 = vmatprep.mubr.bf16.mxu0 0
        %520 = vmatmul.mubr.bf16.gmra.mxu0 %v429
        %v521 = vpop.f32.mrf.mxu0
        %v522 = vadd.f32 0.0, %v521
        %v523 = vpop.f32.mrf.mxu0
        %v524 = vpop.f32.mrf.mxu0
        %v525 = vadd.f32 0.0, %v524
        %v526 = vpop.f32.mrf.mxu0
        %527 = vdwg.mxu0
        %v532 = vunpack.c.l.b16 %v356
        %v533 = vunpack.c.l.b16 %v357
        %v534 = vunpack.c.l.b16 %v358
        %v535 = vunpack.c.l.b16 %v359
        %v536 = vpack.c.b16 %v533, %v532
        %v537 = vpack.c.b16 %v535, %v534
        %v541 = vsel %vm406, %v348, 0
        %v544 = vsel %vm406, %v349, 0
        %v547 = vsel %vm406, %v350, 0
        %v550 = vsel %vm406, %v351, 0
        %v553 = vsel %vm406, %v352, 0
        %v556 = vsel %vm406, %v353, 0
        %v559 = vsel %vm406, %v354, 0
        %v562 = vsel %vm406, %v355, 0
        %564 = vmatprep.subr.bf16.mxu0 0
        %565 = vmatpush1.bf16.msra.mxu0 0
        %566 = vmatprep.subr.bf16.mxu0 0
        %567 = vmatpush1.bf16.msra.mxu0 0
        %568 = vmatprep.subr.bf16.mxu0 0
        %569 = vmatpush1.bf16.msra.mxu0 0
        %570 = vmatprep.subr.bf16.mxu0 0
        %571 = vmatpush1.bf16.msra.mxu0 0
        %572 = vmatprep.subr.bf16.mxu0 0
        %573 = vmatpush1.bf16.msra.mxu0 0
        %574 = vmatprep.subr.bf16.mxu0 0
        %575 = vmatpush1.bf16.msra.mxu0 0
        %576 = vmatprep.subr.bf16.mxu0 0
        %577 = vmatpush1.bf16.msra.mxu0 %v537
        %578 = vmatprep.subr.bf16.mxu0 0
        %579 = vmatpush1.bf16.msra.mxu0 %v536
        %580 = vmatprep.subr.bf16.mxu0 0
        %581 = vmatpush2.bf16.msra.mxu0 0
        %582 = vmatprep.subr.bf16.mxu0 0
        %583 = vmatpush2.bf16.msra.mxu0 0
        %584 = vmatprep.subr.bf16.mxu0 0
        %585 = vmatpush2.bf16.msra.mxu0 0
        %586 = vmatprep.subr.bf16.mxu0 0
        %587 = vmatpush2.bf16.msra.mxu0 0
        %588 = vmatprep.subr.bf16.mxu0 0
        %589 = vmatpush2.bf16.msra.mxu0 0
        %590 = vmatprep.subr.bf16.mxu0 0
        %591 = vmatpush2.bf16.msra.mxu0 0
        %592 = vmatprep.subr.bf16.mxu0 0
        %593 = vmatpush2.bf16.msra.mxu0 0
        %594 = vmatprep.subr.bf16.mxu0 0
        %595 = vmatpush2.bf16.msra.mxu0 0
        %596 = vmatprep.mubr.bf16.mxu0 0
        %597 = vmatmul.mubr.bf16.gmra.mxu0 %v541
        %v598 = vpop.f32.mrf.mxu0
        %v599 = vadd.f32 %v466, %v598
        %v600 = vpop.f32.mrf.mxu0
        %v601 = vpop.f32.mrf.mxu0
        %v602 = vadd.f32 %v469, %v601
        %v603 = vpop.f32.mrf.mxu0
        %604 = vmatprep.mubr.bf16.mxu0 0
        %605 = vmatmul.mubr.bf16.gmra.mxu0 %v544
        %v606 = vpop.f32.mrf.mxu0
        %v607 = vadd.f32 %v474, %v606
        %v608 = vpop.f32.mrf.mxu0
        %v609 = vpop.f32.mrf.mxu0
        %v610 = vadd.f32 %v477, %v609
        %v611 = vpop.f32.mrf.mxu0
        %612 = vmatprep.mubr.bf16.mxu0 0
        %613 = vmatmul.mubr.bf16.gmra.mxu0 %v547
        %v614 = vpop.f32.mrf.mxu0
        %v615 = vadd.f32 %v482, %v614
        %v616 = vpop.f32.mrf.mxu0
        %v617 = vpop.f32.mrf.mxu0
        %v618 = vadd.f32 %v485, %v617
        %v619 = vpop.f32.mrf.mxu0
        %620 = vmatprep.mubr.bf16.mxu0 0
        %621 = vmatmul.mubr.bf16.gmra.mxu0 %v550
        %v622 = vpop.f32.mrf.mxu0
        %v623 = vadd.f32 %v490, %v622
        %v624 = vpop.f32.mrf.mxu0
        %v625 = vpop.f32.mrf.mxu0
        %v626 = vadd.f32 %v493, %v625
        %v627 = vpop.f32.mrf.mxu0
        %628 = vmatprep.mubr.bf16.mxu0 0
        %629 = vmatmul.mubr.bf16.gmra.mxu0 %v553
        %v630 = vpop.f32.mrf.mxu0
        %v631 = vadd.f32 %v498, %v630
        %v632 = vpop.f32.mrf.mxu0
        %v633 = vpop.f32.mrf.mxu0
        %v634 = vadd.f32 %v501, %v633
        %v635 = vpop.f32.mrf.mxu0
        %636 = vmatprep.mubr.bf16.mxu0 0
        %637 = vmatmul.mubr.bf16.gmra.mxu0 %v556
        %v638 = vpop.f32.mrf.mxu0
        %v639 = vadd.f32 %v506, %v638
        %v640 = vpop.f32.mrf.mxu0
        %v641 = vpop.f32.mrf.mxu0
        %v642 = vadd.f32 %v509, %v641
        %v643 = vpop.f32.mrf.mxu0
        %644 = vmatprep.mubr.bf16.mxu0 0
        %645 = vmatmul.mubr.bf16.gmra.mxu0 %v559
        %v646 = vpop.f32.mrf.mxu0
        %v647 = vadd.f32 %v514, %v646
        %v648 = vpop.f32.mrf.mxu0
        %v649 = vpop.f32.mrf.mxu0
        %v650 = vadd.f32 %v517, %v649
        %v651 = vpop.f32.mrf.mxu0
        %652 = vmatprep.mubr.bf16.mxu0 0
        %653 = vmatmul.mubr.bf16.gmra.mxu0 %v562
        %v654 = vpop.f32.mrf.mxu0
        %v655 = vadd.f32 %v522, %v654
        %v656 = vpop.f32.mrf.mxu0
        %v657 = vpop.f32.mrf.mxu0
        %v658 = vadd.f32 %v525, %v657
        %v659 = vpop.f32.mrf.mxu0
        %660 = vdwg.mxu0
        %s661 = scalar_lea.vmem %s283, 16
        %v662 = vld [vmem:[%s661] sm:$0xf]
        %v663 = vld [vmem:[%s661 + $0x4] sm:$0xf]
        %v664 = vunpack.c.l.bf16 %v662
        %v665 = vunpack.c.l.bf16 %v663
        %v666 = vmul.f32 %v312, %v664
        %v667 = vmul.f32 %v313, %v665
        %v668 = vmul.f32 %v314, %v664
        %v669 = vmul.f32 %v315, %v665
        %v670 = vmul.f32 %v316, %v664
        %v671 = vmul.f32 %v317, %v665
        %v672 = vmul.f32 %v318, %v664
        %v673 = vmul.f32 %v319, %v665
        %v674 = vmul.f32 %v320, %v664
        %v675 = vmul.f32 %v321, %v665
        %v676 = vmul.f32 %v322, %v664
        %v677 = vmul.f32 %v323, %v665
        %v678 = vmul.f32 %v324, %v664
        %v679 = vmul.f32 %v325, %v665
        %v680 = vmul.f32 %v326, %v664
        %v681 = vmul.f32 %v327, %v665
        %v682 = vpack.c.bf16 %v667, %v666
        %v683 = vpack.c.bf16 %v669, %v668
        %v684 = vpack.c.bf16 %v671, %v670
        %v685 = vpack.c.bf16 %v673, %v672
        %v686 = vpack.c.bf16 %v675, %v674
        %v687 = vpack.c.bf16 %v677, %v676
        %v688 = vpack.c.bf16 %v679, %v678
        %v689 = vpack.c.bf16 %v681, %v680
        %s690 = scalar_lea.vmem %s2, 32
        %v691 = vld [vmem:[%s690] sm:$0xf]
        %v692 = vld [vmem:[%s690 + $0x4] sm:$0xf]
        %v693 = vld [vmem:[%s690 + $0x8] sm:$0xf]
        %v694 = vld [vmem:[%s690 + $0xc] sm:$0xf]
        %v699 = vunpack.c.l.b16 %v691
        %v700 = vunpack.c.l.b16 %v692
        %v701 = vunpack.c.l.b16 %v693
        %v702 = vunpack.c.l.b16 %v694
        %v703 = vpack.c.b16 %v700, %v699
        %v704 = vpack.c.b16 %v702, %v701
        %v708 = vsel %vm406, %v682, 0
        %v711 = vsel %vm406, %v683, 0
        %v714 = vsel %vm406, %v684, 0
        %v717 = vsel %vm406, %v685, 0
        %v720 = vsel %vm406, %v686, 0
        %v723 = vsel %vm406, %v687, 0
        %v726 = vsel %vm406, %v688, 0
        %v729 = vsel %vm406, %v689, 0
        %731 = vmatprep.subr.bf16.mxu0 0
        %732 = vmatpush1.bf16.msra.mxu0 0
        %733 = vmatprep.subr.bf16.mxu0 0
        %734 = vmatpush1.bf16.msra.mxu0 0
        %735 = vmatprep.subr.bf16.mxu0 0
        %736 = vmatpush1.bf16.msra.mxu0 0
        %737 = vmatprep.subr.bf16.mxu0 0
        %738 = vmatpush1.bf16.msra.mxu0 0
        %739 = vmatprep.subr.bf16.mxu0 0
        %740 = vmatpush1.bf16.msra.mxu0 0
        %741 = vmatprep.subr.bf16.mxu0 0
        %742 = vmatpush1.bf16.msra.mxu0 0
        %743 = vmatprep.subr.bf16.mxu0 0
        %744 = vmatpush1.bf16.msra.mxu0 %v704
        %745 = vmatprep.subr.bf16.mxu0 0
        %746 = vmatpush1.bf16.msra.mxu0 %v703
        %747 = vmatprep.subr.bf16.mxu0 0
        %748 = vmatpush2.bf16.msra.mxu0 0
        %749 = vmatprep.subr.bf16.mxu0 0
        %750 = vmatpush2.bf16.msra.mxu0 0
        %751 = vmatprep.subr.bf16.mxu0 0
        %752 = vmatpush2.bf16.msra.mxu0 0
        %753 = vmatprep.subr.bf16.mxu0 0
        %754 = vmatpush2.bf16.msra.mxu0 0
        %755 = vmatprep.subr.bf16.mxu0 0
        %756 = vmatpush2.bf16.msra.mxu0 0
        %757 = vmatprep.subr.bf16.mxu0 0
        %758 = vmatpush2.bf16.msra.mxu0 0
        %759 = vmatprep.subr.bf16.mxu0 0
        %760 = vmatpush2.bf16.msra.mxu0 0
        %761 = vmatprep.subr.bf16.mxu0 0
        %762 = vmatpush2.bf16.msra.mxu0 0
        %763 = vmatprep.mubr.bf16.mxu0 0
        %764 = vmatmul.mubr.bf16.gmra.mxu0 %v708
        %v765 = vpop.f32.mrf.mxu0
        %v766 = vadd.f32 0.0, %v765
        %v767 = vpop.f32.mrf.mxu0
        %v768 = vpop.f32.mrf.mxu0
        %v769 = vadd.f32 0.0, %v768
        %v770 = vpop.f32.mrf.mxu0
        %771 = vmatprep.mubr.bf16.mxu0 0
        %772 = vmatmul.mubr.bf16.gmra.mxu0 %v711
        %v773 = vpop.f32.mrf.mxu0
        %v774 = vadd.f32 0.0, %v773
        %v775 = vpop.f32.mrf.mxu0
        %v776 = vpop.f32.mrf.mxu0
        %v777 = vadd.f32 0.0, %v776
        %v778 = vpop.f32.mrf.mxu0
        %779 = vmatprep.mubr.bf16.mxu0 0
        %780 = vmatmul.mubr.bf16.gmra.mxu0 %v714
        %v781 = vpop.f32.mrf.mxu0
        %v782 = vadd.f32 0.0, %v781
        %v783 = vpop.f32.mrf.mxu0
        %v784 = vpop.f32.mrf.mxu0
        %v785 = vadd.f32 0.0, %v784
        %v786 = vpop.f32.mrf.mxu0
        %787 = vmatprep.mubr.bf16.mxu0 0
        %788 = vmatmul.mubr.bf16.gmra.mxu0 %v717
        %v789 = vpop.f32.mrf.mxu0
        %v790 = vadd.f32 0.0, %v789
        %v791 = vpop.f32.mrf.mxu0
        %v792 = vpop.f32.mrf.mxu0
        %v793 = vadd.f32 0.0, %v792
        %v794 = vpop.f32.mrf.mxu0
        %795 = vmatprep.mubr.bf16.mxu0 0
        %796 = vmatmul.mubr.bf16.gmra.mxu0 %v720
        %v797 = vpop.f32.mrf.mxu0
        %v798 = vadd.f32 0.0, %v797
        %v799 = vpop.f32.mrf.mxu0
        %v800 = vpop.f32.mrf.mxu0
        %v801 = vadd.f32 0.0, %v800
        %v802 = vpop.f32.mrf.mxu0
        %803 = vmatprep.mubr.bf16.mxu0 0
        %804 = vmatmul.mubr.bf16.gmra.mxu0 %v723
        %v805 = vpop.f32.mrf.mxu0
        %v806 = vadd.f32 0.0, %v805
        %v807 = vpop.f32.mrf.mxu0
        %v808 = vpop.f32.mrf.mxu0
        %v809 = vadd.f32 0.0, %v808
        %v810 = vpop.f32.mrf.mxu0
        %811 = vmatprep.mubr.bf16.mxu0 0
        %812 = vmatmul.mubr.bf16.gmra.mxu0 %v726
        %v813 = vpop.f32.mrf.mxu0
        %v814 = vadd.f32 0.0, %v813
        %v815 = vpop.f32.mrf.mxu0
        %v816 = vpop.f32.mrf.mxu0
        %v817 = vadd.f32 0.0, %v816
        %v818 = vpop.f32.mrf.mxu0
        %819 = vmatprep.mubr.bf16.mxu0 0
        %820 = vmatmul.mubr.bf16.gmra.mxu0 %v729
        %v821 = vpop.f32.mrf.mxu0
        %v822 = vadd.f32 0.0, %v821
        %v823 = vpop.f32.mrf.mxu0
        %v824 = vpop.f32.mrf.mxu0
        %v825 = vadd.f32 0.0, %v824
        %v826 = vpop.f32.mrf.mxu0
        %827 = vdwg.mxu0
        %v828 = vadd.f32 %v599, %v766
        %v829 = vadd.f32 %v602, %v769
        %v830 = vadd.f32 %v607, %v774
        %v831 = vadd.f32 %v610, %v777
        %v832 = vadd.f32 %v615, %v782
        %v833 = vadd.f32 %v618, %v785
        %v834 = vadd.f32 %v623, %v790
        %v835 = vadd.f32 %v626, %v793
        %v836 = vadd.f32 %v631, %v798
        %v837 = vadd.f32 %v634, %v801
        %v838 = vadd.f32 %v639, %v806
        %v839 = vadd.f32 %v642, %v809
        %v840 = vadd.f32 %v647, %v814
        %v841 = vadd.f32 %v650, %v817
        %v842 = vadd.f32 %v655, %v822
        %v843 = vadd.f32 %v658, %v825
        %v844 = vpack.c.bf16 %v829, %v828
        %v845 = vpack.c.bf16 %v831, %v830
        %v846 = vpack.c.bf16 %v833, %v832
        %v847 = vpack.c.bf16 %v835, %v834
        %v848 = vpack.c.bf16 %v837, %v836
        %v849 = vpack.c.bf16 %v839, %v838
        %v850 = vpack.c.bf16 %v841, %v840
        %v851 = vpack.c.bf16 %v843, %v842
        %v860 = vunpack.c.l.b16 %v844
        %v861 = vunpack.c.h.b16 %v844
        %v862 = vunpack.c.l.b16 %v845
        %v863 = vunpack.c.h.b16 %v845
        %v864 = vunpack.c.l.b16 %v846
        %v865 = vunpack.c.h.b16 %v846
        %v866 = vunpack.c.l.b16 %v847
        %v867 = vunpack.c.h.b16 %v847
        %v868 = vunpack.c.l.b16 %v848
        %v869 = vunpack.c.h.b16 %v848
        %v870 = vunpack.c.l.b16 %v849
        %v871 = vunpack.c.h.b16 %v849
        %v872 = vunpack.c.l.b16 %v850
        %v873 = vunpack.c.h.b16 %v850
        %v874 = vunpack.c.l.b16 %v851
        %v875 = vunpack.c.h.b16 %v851
        %v876 = vpack.c.b16 %v860, %v860
        %v877 = vpack.c.b16 %v861, %v861
        %v878 = vpack.c.b16 %v862, %v862
        %v879 = vpack.c.b16 %v863, %v863
        %v880 = vpack.c.b16 %v864, %v864
        %v881 = vpack.c.b16 %v865, %v865
        %v882 = vpack.c.b16 %v866, %v866
        %v883 = vpack.c.b16 %v867, %v867
        %v884 = vpack.c.b16 %v868, %v868
        %v885 = vpack.c.b16 %v869, %v869
        %v886 = vpack.c.b16 %v870, %v870
        %v887 = vpack.c.b16 %v871, %v871
        %v888 = vpack.c.b16 %v872, %v872
        %v889 = vpack.c.b16 %v873, %v873
        %v890 = vpack.c.b16 %v874, %v874
        %v891 = vpack.c.b16 %v875, %v875
        %vm908 = vcmask 60416
        %909 = vst.msk [vmem:[%s293] sm:$0xf] %vm908, %v876
        %910 = vst.msk [vmem:[%s293 + $0x4] sm:$0xf] %vm908, %v877
        %911 = vst.msk [vmem:[%s293 + $0x8] sm:$0xf] %vm908, %v878
        %912 = vst.msk [vmem:[%s293 + $0xc] sm:$0xf] %vm908, %v879
        %913 = vst.msk [vmem:[%s293 + $0x10] sm:$0xf] %vm908, %v880
        %914 = vst.msk [vmem:[%s293 + $0x14] sm:$0xf] %vm908, %v881
        %915 = vst.msk [vmem:[%s293 + $0x18] sm:$0xf] %vm908, %v882
        %916 = vst.msk [vmem:[%s293 + $0x1c] sm:$0xf] %vm908, %v883
        %917 = vst.msk [vmem:[%s293 + $0x20] sm:$0xf] %vm908, %v884
        %918 = vst.msk [vmem:[%s293 + $0x24] sm:$0xf] %vm908, %v885
        %919 = vst.msk [vmem:[%s293 + $0x28] sm:$0xf] %vm908, %v886
        %920 = vst.msk [vmem:[%s293 + $0x2c] sm:$0xf] %vm908, %v887
        %921 = vst.msk [vmem:[%s293 + $0x30] sm:$0xf] %vm908, %v888
        %922 = vst.msk [vmem:[%s293 + $0x34] sm:$0xf] %vm908, %v889
        %923 = vst.msk [vmem:[%s293 + $0x38] sm:$0xf] %vm908, %v890
        %924 = vst.msk [vmem:[%s293 + $0x3c] sm:$0xf] %vm908, %v891
        %vm925 = vcmask 64512
        %v926 = vsel %vm925, %v828, 0.0
        %v927 = vsel %vm925, %v829, 0.0
        %v928 = vadd.f32 %v926, %v927
        %v929 = vsel %vm925, %v830, 0.0
        %v930 = vadd.f32 %v928, %v929
        %v931 = vsel %vm925, %v831, 0.0
        %v932 = vadd.f32 %v930, %v931
        %v933 = vsel %vm925, %v832, 0.0
        %v934 = vadd.f32 %v932, %v933
        %v935 = vsel %vm925, %v833, 0.0
        %v936 = vadd.f32 %v934, %v935
        %v937 = vsel %vm925, %v834, 0.0
        %v938 = vadd.f32 %v936, %v937
        %v939 = vsel %vm925, %v835, 0.0
        %v940 = vadd.f32 %v938, %v939
        %v941 = vsel %vm925, %v836, 0.0
        %v942 = vadd.f32 %v940, %v941
        %v943 = vsel %vm925, %v837, 0.0
        %v944 = vadd.f32 %v942, %v943
        %v945 = vsel %vm925, %v838, 0.0
        %v946 = vadd.f32 %v944, %v945
        %v947 = vsel %vm925, %v839, 0.0
        %v948 = vadd.f32 %v946, %v947
        %v949 = vsel %vm925, %v840, 0.0
        %v950 = vadd.f32 %v948, %v949
        %v951 = vsel %vm925, %v841, 0.0
        %v952 = vadd.f32 %v950, %v951
        %v953 = vsel %vm925, %v842, 0.0
        %v954 = vadd.f32 %v952, %v953
        %v955 = vsel %vm925, %v843, 0.0
        %v956 = vadd.f32 %v954, %v955
        %v957 = vrot.slane %v956, 4
        %v958 = vadd.f32 %v956, %v957
        %v959 = vrot.slane %v958, 2
        %v960 = vadd.f32 %v958, %v959
        %v961 = vrot.slane %v960, 1
        %v962 = vadd.f32 %v960, %v961
        %v963 = vmul.f32 %v828, %v828
        %v964 = vmul.f32 %v829, %v829
        %v965 = vmul.f32 %v830, %v830
        %v966 = vmul.f32 %v831, %v831
        %v967 = vmul.f32 %v832, %v832
        %v968 = vmul.f32 %v833, %v833
        %v969 = vmul.f32 %v834, %v834
        %v970 = vmul.f32 %v835, %v835
        %v971 = vmul.f32 %v836, %v836
        %v972 = vmul.f32 %v837, %v837
        %v973 = vmul.f32 %v838, %v838
        %v974 = vmul.f32 %v839, %v839
        %v975 = vmul.f32 %v840, %v840
        %v976 = vmul.f32 %v841, %v841
        %v977 = vmul.f32 %v842, %v842
        %v978 = vmul.f32 %v843, %v843
        %v979 = vsel %vm925, %v963, 0.0
        %v980 = vsel %vm925, %v964, 0.0
        %v981 = vadd.f32 %v979, %v980
        %v982 = vsel %vm925, %v965, 0.0
        %v983 = vadd.f32 %v981, %v982
        %v984 = vsel %vm925, %v966, 0.0
        %v985 = vadd.f32 %v983, %v984
        %v986 = vsel %vm925, %v967, 0.0
        %v987 = vadd.f32 %v985, %v986
        %v988 = vsel %vm925, %v968, 0.0
        %v989 = vadd.f32 %v987, %v988
        %v990 = vsel %vm925, %v969, 0.0
        %v991 = vadd.f32 %v989, %v990
        %v992 = vsel %vm925, %v970, 0.0
        %v993 = vadd.f32 %v991, %v992
        %v994 = vsel %vm925, %v971, 0.0
        %v995 = vadd.f32 %v993, %v994
        %v996 = vsel %vm925, %v972, 0.0
        %v997 = vadd.f32 %v995, %v996
        %v998 = vsel %vm925, %v973, 0.0
        %v999 = vadd.f32 %v997, %v998
        %v1000 = vsel %vm925, %v974, 0.0
        %v1001 = vadd.f32 %v999, %v1000
        %v1002 = vsel %vm925, %v975, 0.0
        %v1003 = vadd.f32 %v1001, %v1002
        %v1004 = vsel %vm925, %v976, 0.0
        %v1005 = vadd.f32 %v1003, %v1004
        %v1006 = vsel %vm925, %v977, 0.0
        %v1007 = vadd.f32 %v1005, %v1006
        %v1008 = vsel %vm925, %v978, 0.0
        %v1009 = vadd.f32 %v1007, %v1008
        %v1010 = vrot.slane %v1009, 4
        %v1011 = vadd.f32 %v1009, %v1010
        %v1012 = vrot.slane %v1011, 2
        %v1013 = vadd.f32 %v1011, %v1012
        %v1014 = vrot.slane %v1013, 1
        %v1015 = vadd.f32 %v1013, %v1014
        %vm1016 = vcmask 1040384
        %v1017 = vsel %vm1016, %v962, %v1015
        %vm1018 = vcmask 1041408
        %v1019 = vsel %vm1018, %v1017, 0.0
        %1020 = vst.msk [vmem:[%s273] sm:$0xff] %vm925, %v1019
        %s1021 = smul.u32 2, %s27
        %p1022 = scmp.lt.s32.totalorder %s26, 1
        %s1023 = scalar_select %p1022, %s26, 1
        %p1024 = scmp.lt.s32.totalorder %s1021, 1
        %s1025 = scalar_select %p1024, %s1021, 1
        %s1026 = smul.addr %s1023, 16
        %s1027 = sadd.s32 %s1025, %s1026
        %s1028 = smul.addr %s1027, 4
        %s1029 = scalar_lea.vmem %s3, %s1028
        %s1030 = sand.u32 %s149, 1
        %s1031 = scalar_lea.sflag [#allocation4], %s1030
        %s1032 = sand.u32 %s149, 1
        %s1033 = smul.addr %s1032, 8
        %s1034 = scalar_lea.vmem [#allocation5], %s1033
        // Predicated region
        $region37: #{tpu_custom_call.1} parent=31 // pred_check
          %p1035 = pneg %p131
        $region38: #{tpu_custom_call.1} parent=31 // pred_check_branch
          %1037 = sbr.rel (%p1035) target = $region40
        $region39: #{tpu_custom_call.1} parent=31 // pred_region
          %s1038 = smul.u32 2, %s27
        $region40: #{tpu_custom_call.1} parent=31 // pred_fallthru
          _
        // Predicated region
        $region41: #{tpu_custom_call.1} parent=31 // pred_check
          %p1039 = pneg %p159
        $region42: #{tpu_custom_call.1} parent=31 // pred_check_branch
          %1041 = sbr.rel (%p1039) target = $region44
        $region43: #{tpu_custom_call.1} parent=31 // pred_region
          %s1043 = ssub.s32 128, 128
          %1044 = vsyncadd %s1031, %s1043
          %s1045 = sadd.s32 %s27, %s26
          %s1046 = smul.addr %s1045, 128
          %s1047 = scalar_lea.hbm %s4, %s1046
          %s1049 = sshll.u32 %s1034, 4
          %s1050 = int_to_ptr.vmem [resolvable:$true] %s1049
          %1052 = dma.vmem_to_hbm [thread:$0]  %s1050, 128, %s1047, %s1031
        $region44: #{tpu_custom_call.1} parent=31 // pred_fallthru
          _
      $region32: #{tpu_custom_call.1} parent=5 // pred_fallthru
        _
      %p1053 = scmp.le.s32.totalorder 2, %s17
      // Predicated region
      $region45: #{tpu_custom_call.1} parent=5 // pred_check
        %p1054 = pneg %p1053
      $region46: #{tpu_custom_call.1} parent=5 // pred_check_branch
        %1056 = sbr.rel (%p1054) target = $region48
      $region47: #{tpu_custom_call.1} parent=5 // pred_region
        %s1057 = ssub.s32 %s17, 2
        // Predicated region
        $region49: #{tpu_custom_call.1} parent=47 // pred_check
          %p1058 = pneg %p137
        $region50: #{tpu_custom_call.1} parent=47 // pred_check_branch
          %1060 = sbr.rel (%p1058) target = $region52
        $region51: #{tpu_custom_call.1} parent=47 // pred_region
          %s1061 = smul.u32 2, %s29
          %p1062 = scmp.lt.s32.totalorder %s28, 1
          %s1063 = scalar_select %p1062, %s28, 1
          %p1064 = scmp.lt.s32.totalorder %s1061, 1
          %s1065 = scalar_select %p1064, %s1061, 1
          %s1066 = smul.addr %s1063, 16
          %s1067 = sadd.s32 %s1065, %s1066
          %s1068 = smul.addr %s1067, 4
          %s1069 = scalar_lea.vmem %s3, %s1068
        $region52: #{tpu_custom_call.1} parent=47 // pred_fallthru
          _
        // Predicated region
        $region53: #{tpu_custom_call.1} parent=47 // pred_check
          %p1070 = pneg %p165
        $region54: #{tpu_custom_call.1} parent=47 // pred_check_branch
          %1072 = sbr.rel (%p1070) target = $region56
        $region55: #{tpu_custom_call.1} parent=47 // pred_region
          %s1073 = sand.u32 %s150, 1
          %s1074 = scalar_lea.sflag [#allocation4], %s1073
          %s1075 = sand.u32 %s150, 1
          %s1076 = smul.addr %s1075, 8
          %s1077 = scalar_lea.vmem [#allocation5], %s1076
          %1078 = dma.done %s1074, 128
        $region56: #{tpu_custom_call.1} parent=47 // pred_fallthru
          _
      $region48: #{tpu_custom_call.1} parent=5 // pred_fallthru
        _
    $region6: #{tpu_custom_call.1} parent=1 // loop_footer
      %s21 = sadd.s32 1, %s17
    $region7: #{tpu_custom_call.1} parent=1 // loop_footer_branch
      %16 = sbr.rel target = $region3
    $region8: #{tpu_custom_call.1} parent=1 // loop_exit
      _
    %1079 = vsyncpa [#allocation3], 1
    %s1080 = scalar_lea.sflag [#allocation3], 1
    %1081 = vsyncpa %s1080, 1
    %1082 = vsyncpa [#allocation4], 1
    %s1083 = scalar_lea.sflag [#allocation4], 1
    %1084 = vsyncpa %s1083, 1

</llo_original>
